<compile_context>
chip_gen: v5e
topology: v5e:2x2
jax: 0.10.0
libtpu: 0.0.40
codegen_flags: <defaults>
</compile_context>

<pallas_src>
import jax
import jax.numpy as jnp
from jax import lax
from jax.experimental import pallas as pl
from jax.experimental.pallas import tpu as pltpu

FEAT_DIM = 16
HID_DIM = 32
LOGIT_COL = FEAT_DIM       # column of the fused output carrying the fc3 logit
OUT_COLS = 32              # fused output width: feat (16) | logit (1) | zero pad


def _round_up(x, m):
    return (x + m - 1) // m * m


def _mlp_kernel(x_ref, w1_ref, b1_ref, wc_ref, bc_ref, out_ref):
    """One batch tile: fc1 -> ReLU -> fused (fc2 | fc3) -> sigmoid on logit col."""
    # fc1 + ReLU.  Dropout is the identity in eval mode.
    h1 = jnp.dot(x_ref[...], w1_ref[...], preferred_element_type=jnp.float32)
    h1 = jnp.maximum(h1 + b1_ref[...], 0.0)                        # (TM, 32) f32

    # Fused fc2 + folded fc3: cols 0:16 = feat, col 16 = logit, rest zero pad.
    y = jnp.dot(h1.astype(wc_ref.dtype), wc_ref[...],
                preferred_element_type=jnp.float32) + bc_ref[...]  # (TM, 32) f32

    # Sigmoid only on the logit column (EUP exp + reciprocal); feat passes through.
    col = lax.broadcasted_iota(jnp.int32, y.shape, 1)
    sig = pl.reciprocal(1.0 + jnp.exp(-y), approx=False)
    out_ref[...] = jnp.where(col == LOGIT_COL, sig, y)


def network_forward(x, params, *, tile_rows=512, use_bf16_matmul=False):
    """x: (N, input_dim) float32.  Returns [scores (N, 1), feat (N, 16)]."""
    w1, b1, w2, b2, w3, b3 = params
    n, d = x.shape

    # Fold fc3 into fc2 (dropout between them is identity, no nonlinearity).
    wc = jnp.zeros((HID_DIM, OUT_COLS), jnp.float32)
    wc = wc.at[:, :FEAT_DIM].set(w2)
    wc = wc.at[:, LOGIT_COL:LOGIT_COL + 1].set(w2 @ w3)
    bc = jnp.zeros((1, OUT_COLS), jnp.float32)
    bc = bc.at[:, :FEAT_DIM].set(b2)
    bc = bc.at[:, LOGIT_COL:LOGIT_COL + 1].set(b2 @ w3 + b3)

    if use_bf16_matmul:
        # Halve HBM traffic on the dominant read (x); keep epilogue math in f32.
        x = x.astype(jnp.bfloat16)
        w1 = w1.astype(jnp.bfloat16)
        wc = wc.astype(jnp.bfloat16)

    # Batch tile: multiple of 8 sublanes; pad N up to a whole number of tiles.
    tm = min(tile_rows, _round_up(n, 8))
    n_pad = _round_up(n, tm)
    if n_pad != n:
        x = jnp.pad(x, ((0, n_pad - n), (0, 0)))

    out = pl.pallas_call(
        _mlp_kernel,
        out_shape=jax.ShapeDtypeStruct((n_pad, OUT_COLS), jnp.float32),
        grid=(n_pad // tm,),
        in_specs=[
            # Batch-tiled input: pipelined, double-buffered HBM->VMEM DMA.
            pl.BlockSpec((tm, d), lambda i: (i, 0)),
            # Weights/biases: same (0, 0) block every step -> DMA'd once,
            # VMEM-resident across the whole grid.
            pl.BlockSpec((d, HID_DIM), lambda i: (0, 0)),
            pl.BlockSpec((1, HID_DIM), lambda i: (0, 0)),
            pl.BlockSpec((HID_DIM, OUT_COLS), lambda i: (0, 0)),
            pl.BlockSpec((1, OUT_COLS), lambda i: (0, 0)),
        ],
        # Single fused output slab (feat + score in one 32-wide store).
        out_specs=pl.BlockSpec((tm, OUT_COLS), lambda i: (i, 0)),
        compiler_params=pltpu.CompilerParams(
            dimension_semantics=("parallel",)),  # shard batch tiles across TCs (v7x)
    )(x, w1, b1, wc, bc)

    feat = out[:n, :FEAT_DIM]
    scores = out[:n, LOGIT_COL:LOGIT_COL + 1]
    return [scores, feat]


def init_params(key, input_dim):
    """Deterministic init mimicking nn.Linear's U(-1/sqrt(fan_in), 1/sqrt(fan_in))."""
    def linear(k, fan_in, fan_out):
        kw, kb = jax.random.split(k)
        bound = 1.0 / jnp.sqrt(jnp.float32(fan_in))
        w = jax.random.uniform(kw, (fan_in, fan_out), jnp.float32, -bound, bound)
        b = jax.random.uniform(kb, (1, fan_out), jnp.float32, -bound, bound)
        return w, b

    k1, k2, k3 = jax.random.split(key, 3)
    w1, b1 = linear(k1, input_dim, HID_DIM)
    w2, b2 = linear(k2, HID_DIM, FEAT_DIM)
    w3, b3 = linear(k3, FEAT_DIM, 1)
    return (w1, b1, w2, b2, w3, b3)


def _reference(x, params):
    w1, b1, w2, b2, w3, b3 = params
    h1 = jnp.maximum(x @ w1 + b1, 0.0)
    feat = h1 @ w2 + b2
    out = jax.nn.sigmoid(feat @ w3 + b3)
    return out, feat


if __name__ == "__main__":
    key = jax.random.PRNGKey(0)
    k_x, k_p, k_x2 = jax.random.split(key, 3)

    # Primary small case (single tile).
    batch, input_dim = 8, 32
    x = jax.random.normal(k_x, (batch, input_dim), dtype=jnp.float32)
    params = init_params(k_p, input_dim)

    scores, feat = network_forward(x, params)
    jax.block_until_ready((scores, feat))
    ref_scores, ref_feat = _reference(x, params)
    assert scores.shape == (batch, 1) and feat.shape == (batch, FEAT_DIM)
    assert jnp.allclose(scores, ref_scores, atol=1e-4, rtol=1e-4)
    assert jnp.allclose(feat, ref_feat, atol=1e-4, rtol=1e-4)

    # Multi-tile case: exercises the pipelined batch grid + row padding.
    batch2 = 200
    x2 = jax.random.normal(k_x2, (batch2, input_dim), dtype=jnp.float32)
    scores2, feat2 = network_forward(x2, params, tile_rows=64)
    jax.block_until_ready((scores2, feat2))
    ref_scores2, ref_feat2 = _reference(x2, params)
    assert scores2.shape == (batch2, 1) and feat2.shape == (batch2, FEAT_DIM)
    assert jnp.allclose(scores2, ref_scores2, atol=1e-4, rtol=1e-4)
    assert jnp.allclose(feat2, ref_feat2, atol=1e-4, rtol=1e-4)

    # bf16-matmul variant (halves the dominant HBM read); looser tolerance.
    scores3, feat3 = network_forward(x2, params, tile_rows=64,
                                     use_bf16_matmul=True)
    jax.block_until_ready((scores3, feat3))
    assert jnp.allclose(scores3, ref_scores2, atol=5e-2, rtol=5e-2)
    assert jnp.allclose(feat3, ref_feat2, atol=5e-2, rtol=5e-2)

    print("KERNEL_OK")
</pallas_src>

<mosaic_0001>
module attributes {stable_mosaic.version = 11 : i64} {
  func.func @_mlp_kernel(%arg0: i32, %arg1: memref<8x32xf32, #tpu.memory_space<vmem>>, %arg2: memref<32x32xf32, #tpu.memory_space<vmem>>, %arg3: memref<1x32xf32, #tpu.memory_space<vmem>>, %arg4: memref<32x32xf32, #tpu.memory_space<vmem>>, %arg5: memref<1x32xf32, #tpu.memory_space<vmem>>, %arg6: memref<8x32xf32, #tpu.memory_space<vmem>>) attributes {dimension_semantics = [#tpu.dimension_semantics<parallel>], iteration_bounds = array<i64: 1>, scalar_prefetch = 0 : i64, scratch_operands = 0 : i64, tpu.core_type = #tpu.core_type<tc>, window_params = [{transform_indices = @transform_0, window_bounds = array<i64: 8, 32>}, {pipeline_mode = #tpu.pipeline_mode<synchronous>, transform_indices = @transform_1, window_bounds = array<i64: 32, 32>}, {pipeline_mode = #tpu.pipeline_mode<synchronous>, transform_indices = @transform_2, window_bounds = array<i64: 1, 32>}, {pipeline_mode = #tpu.pipeline_mode<synchronous>, transform_indices = @transform_3, window_bounds = array<i64: 32, 32>}, {pipeline_mode = #tpu.pipeline_mode<synchronous>, transform_indices = @transform_4, window_bounds = array<i64: 1, 32>}, {transform_indices = @transform_5, window_bounds = array<i64: 8, 32>}]} {
    %c0 = arith.constant 0 : index
    %c0_0 = arith.constant 0 : index
    %0 = vector.load %arg1[%c0, %c0_0] : memref<8x32xf32, #tpu.memory_space<vmem>>, vector<8x32xf32>
    %c0_1 = arith.constant 0 : index
    %c0_2 = arith.constant 0 : index
    %1 = vector.load %arg2[%c0_1, %c0_2] : memref<32x32xf32, #tpu.memory_space<vmem>>, vector<32x32xf32>
    %cst = arith.constant dense<0.000000e+00> : vector<8x32xf32>
    %2 = tpu.matmul %0, %1, %cst {dimension_numbers = #tpu.dot_dimension_numbers<[1], [0], [0], [1], [0, 0, 1, 1], [], []>} : vector<8x32xf32>, vector<32x32xf32>, vector<8x32xf32> -> vector<8x32xf32>
    %c0_3 = arith.constant 0 : index
    %c0_4 = arith.constant 0 : index
    %3 = vector.load %arg3[%c0_3, %c0_4] : memref<1x32xf32, #tpu.memory_space<vmem>>, vector<1x32xf32>
    %4 = vector.broadcast %3 : vector<1x32xf32> to vector<8x32xf32>
    %5 = arith.addf %2, %4 : vector<8x32xf32>
    %cst_5 = arith.constant 0.000000e+00 : f32
    %6 = vector.broadcast %cst_5 : f32 to vector<8x32xf32>
    %7 = arith.maximumf %5, %6 : vector<8x32xf32>
    %c0_6 = arith.constant 0 : index
    %c0_7 = arith.constant 0 : index
    %8 = vector.load %arg4[%c0_6, %c0_7] : memref<32x32xf32, #tpu.memory_space<vmem>>, vector<32x32xf32>
    %cst_8 = arith.constant dense<0.000000e+00> : vector<8x32xf32>
    %9 = tpu.matmul %7, %8, %cst_8 {dimension_numbers = #tpu.dot_dimension_numbers<[1], [0], [0], [1], [0, 0, 1, 1], [], []>} : vector<8x32xf32>, vector<32x32xf32>, vector<8x32xf32> -> vector<8x32xf32>
    %c0_9 = arith.constant 0 : index
    %c0_10 = arith.constant 0 : index
    %10 = vector.load %arg5[%c0_9, %c0_10] : memref<1x32xf32, #tpu.memory_space<vmem>>, vector<1x32xf32>
    %11 = vector.broadcast %10 : vector<1x32xf32> to vector<8x32xf32>
    %12 = arith.addf %9, %11 : vector<8x32xf32>
    %13 = tpu.iota {dimensions = array<i32: 1>} : vector<8x32xi32>
    %cst_11 = arith.constant 0.000000e+00 : f32
    %14 = vector.broadcast %cst_11 : f32 to vector<8x32xf32>
    %15 = arith.subf %14, %12 : vector<8x32xf32>
    %16 = math.exp %15 : vector<8x32xf32>
    %cst_12 = arith.constant 1.000000e+00 : f32
    %17 = vector.broadcast %cst_12 : f32 to vector<8x32xf32>
    %18 = arith.addf %17, %16 : vector<8x32xf32>
    %19 = tpu.reciprocal %18 : vector<8x32xf32> -> vector<8x32xf32>
    %c16_i32 = arith.constant 16 : i32
    %20 = vector.broadcast %c16_i32 : i32 to vector<8x32xi32>
    %21 = arith.cmpi eq, %13, %20 : vector<8x32xi32>
    %22 = arith.select %21, %19, %12 : vector<8x32xi1>, vector<8x32xf32>
    %c0_13 = arith.constant 0 : index
    %c0_14 = arith.constant 0 : index
    %23 = vector.load %arg6[%c0_13, %c0_14] : memref<8x32xf32, #tpu.memory_space<vmem>>, vector<8x32xf32>
    tpu.vector_store %arg6[%c0_13, %c0_14], %22 {strides = array<i32>} : memref<8x32xf32, #tpu.memory_space<vmem>>, vector<8x32xf32>,
    return
  }
  func.func @transform_0(%arg0: i32) -> (i32, i32) {
    %c0_i32 = arith.constant 0 : i32
    %c0_i32_0 = arith.constant 0 : i32
    return %arg0, %c0_i32 : i32, i32
  }
  func.func @transform_1(%arg0: i32) -> (i32, i32) {
    %c0_i32 = arith.constant 0 : i32
    %c0_i32_0 = arith.constant 0 : i32
    %c0_i32_1 = arith.constant 0 : i32
    return %c0_i32, %c0_i32_0 : i32, i32
  }
  func.func @transform_2(%arg0: i32) -> (i32, i32) {
    %c0_i32 = arith.constant 0 : i32
    %c0_i32_0 = arith.constant 0 : i32
    %c0_i32_1 = arith.constant 0 : i32
    return %c0_i32, %c0_i32_0 : i32, i32
  }
  func.func @transform_3(%arg0: i32) -> (i32, i32) {
    %c0_i32 = arith.constant 0 : i32
    %c0_i32_0 = arith.constant 0 : i32
    %c0_i32_1 = arith.constant 0 : i32
    return %c0_i32, %c0_i32_0 : i32, i32
  }
  func.func @transform_4(%arg0: i32) -> (i32, i32) {
    %c0_i32 = arith.constant 0 : i32
    %c0_i32_0 = arith.constant 0 : i32
    %c0_i32_1 = arith.constant 0 : i32
    return %c0_i32, %c0_i32_0 : i32, i32
  }
  func.func @transform_5(%arg0: i32) -> (i32, i32) {
    %c0_i32 = arith.constant 0 : i32
    %c0_i32_0 = arith.constant 0 : i32
    return %arg0, %c0_i32 : i32, i32
  }
}

</mosaic_0001>

<llo_original>
// kernel: tpu_custom_call.1
$region0: #{tpu_custom_call.1}
  #allocation0 [shape = 'u32[]', space=smem, size = 0x4, offset = 0x4, fixed_abs, tag = 'smem constant byte address 0x4 - core index']
  #allocation1 [shape = 'u32[72,128]{1,0:T(1,128)}', space=vmem, size = 0x9000, scoped, tag = 'internal scratch']
  %s0 = inlined_call_operand.hbm [shape: f32[8,32], index: 0, kind: input, shape index: {}]
  %s1 = inlined_call_operand.hbm [shape: f32[32,32], index: 1, kind: input, shape index: {}]
  %s2 = inlined_call_operand.vmem [shape: f32[1,32], index: 2, kind: input, shape index: {}]
  %s3 = inlined_call_operand.hbm [shape: f32[32,32], index: 3, kind: input, shape index: {}]
  %s4 = inlined_call_operand.vmem [shape: f32[1,32], index: 4, kind: input, shape index: {}]
  %s5 = inlined_call_operand.hbm [shape: f32[8,32], index: 5, kind: output, shape index: {}]
  %s6 = sld [smem:[#allocation0]]
  $region42: #{tpu_custom_call.1} parent=0
    _
  %s8 = ssub.s32 1, %s6
  %s9 = scalar_select 0, %s8, %s6
  $region1: #{tpu_custom_call.1} parent=0
    #allocation2 [shape = 'u8[4096]{0}', space=vmem, size = 0x1000, scoped, tag = 'input window, operand 0, single buffered']
    #allocation3 [shape = 's32[1]{0}', space=sflag, size = 0x4, scoped, tag = 'scoped memory for tpu_custom_call.1']
    #allocation4 [shape = 's32[1]{0}', space=sflag, size = 0x4, scoped, tag = 'scoped memory for tpu_custom_call.1']
    #allocation5 [shape = 'u8[16384]{0}', space=vmem, size = 0x4000, scoped, tag = 'input window, operand 1, single buffered']
    #allocation6 [shape = 's32[1]{0}', space=sflag, size = 0x4, scoped, tag = 'scoped memory for tpu_custom_call.1']
    #allocation7 [shape = 'u8[16384]{0}', space=vmem, size = 0x4000, scoped, tag = 'input window, operand 3, single buffered']
    #allocation8 [shape = 'u8[4096]{0}', space=vmem, size = 0x1000, scoped, tag = 'output window, operand 0, single buffered']
    %10 = vsyncpa [#allocation3], 0
    %11 = vsyncpa [#allocation6], 0
    %12 = vsyncpa [#allocation4], 0
    // Predicated region
    $region2: #{tpu_custom_call.1} parent=1 // pred_check
      _
    $region3: #{tpu_custom_call.1} parent=1 // pred_check_branch
      %14 = sbr.rel (0) target = $region5
    $region4: #{tpu_custom_call.1} parent=1 // pred_region
      %16 = vsyncadd [#allocation3], 0
      %s18 = sshll.u32 %s0, 4
      %s19 = int_to_ptr.hbm [resolvable:$true] %s18
      %s20 = sshll.u32 [#allocation2], 4
      %s21 = int_to_ptr.vmem [resolvable:$true] %s20
      %23 = dma.hbm_to_vmem [thread:$0]  %s19, 128, %s21, [#allocation3]
    $region5: #{tpu_custom_call.1} parent=1 // pred_fallthru
      _
    // Predicated region
    $region6: #{tpu_custom_call.1} parent=1 // pred_check
      _
    $region7: #{tpu_custom_call.1} parent=1 // pred_check_branch
      %25 = sbr.rel (0) target = $region9
    $region8: #{tpu_custom_call.1} parent=1 // pred_region
      %27 = vsyncadd [#allocation6], 0
      %s28 = sshll.u32 %s1, 4
      %s29 = int_to_ptr.hbm [resolvable:$true] %s28
      %s30 = sshll.u32 [#allocation5], 4
      %s31 = int_to_ptr.vmem [resolvable:$true] %s30
      %36 = dma.hbm_to_vmem [thread:$0]  %s29, 512, %s31, [#allocation6], 128, 128, 8
    $region9: #{tpu_custom_call.1} parent=1 // pred_fallthru
      _
    // Predicated region
    $region10: #{tpu_custom_call.1} parent=1 // pred_check
      _
    $region11: #{tpu_custom_call.1} parent=1 // pred_check_branch
      %38 = sbr.rel (0) target = $region13
    $region12: #{tpu_custom_call.1} parent=1 // pred_region
      _
    $region13: #{tpu_custom_call.1} parent=1 // pred_fallthru
      _
    // Predicated region
    $region14: #{tpu_custom_call.1} parent=1 // pred_check
      _
    $region15: #{tpu_custom_call.1} parent=1 // pred_check_branch
      %40 = sbr.rel (0) target = $region17
    $region16: #{tpu_custom_call.1} parent=1 // pred_region
      %42 = vsyncadd [#allocation6], 0
      %s43 = sshll.u32 %s3, 4
      %s44 = int_to_ptr.hbm [resolvable:$true] %s43
      %s45 = sshll.u32 [#allocation7], 4
      %s46 = int_to_ptr.vmem [resolvable:$true] %s45
      %51 = dma.hbm_to_vmem [thread:$0]  %s44, 512, %s46, [#allocation6], 128, 128, 8
    $region17: #{tpu_custom_call.1} parent=1 // pred_fallthru
      _
    // Predicated region
    $region18: #{tpu_custom_call.1} parent=1 // pred_check
      _
    $region19: #{tpu_custom_call.1} parent=1 // pred_check_branch
      %53 = sbr.rel (0) target = $region21
    $region20: #{tpu_custom_call.1} parent=1 // pred_region
      _
    $region21: #{tpu_custom_call.1} parent=1 // pred_fallthru
      _
    // Predicated region
    $region22: #{tpu_custom_call.1} parent=1 // pred_check
      _
    $region23: #{tpu_custom_call.1} parent=1 // pred_check_branch
      %55 = sbr.rel (0) target = $region25
    $region24: #{tpu_custom_call.1} parent=1 // pred_region
      %57 = dma.done [#allocation3], 128
    $region25: #{tpu_custom_call.1} parent=1 // pred_fallthru
      _
    // Predicated region
    $region26: #{tpu_custom_call.1} parent=1 // pred_check
      _
    $region27: #{tpu_custom_call.1} parent=1 // pred_check_branch
      %59 = sbr.rel (0) target = $region29
    $region28: #{tpu_custom_call.1} parent=1 // pred_region
      %61 = dma.done [#allocation6], 512
    $region29: #{tpu_custom_call.1} parent=1 // pred_fallthru
      _
    // Predicated region
    $region30: #{tpu_custom_call.1} parent=1 // pred_check
      _
    $region31: #{tpu_custom_call.1} parent=1 // pred_check_branch
      %63 = sbr.rel (0) target = $region33
    $region32: #{tpu_custom_call.1} parent=1 // pred_region
      %65 = dma.done [#allocation6], 512
    $region33: #{tpu_custom_call.1} parent=1 // pred_fallthru
      _
    %v66 = vld [vmem:[#allocation2] sm:$0xff]
    %v67 = vld [vmem:[#allocation5] sm:$0xff]
    %v68 = vld [vmem:[#allocation5 + $0x8] sm:$0xff]
    %v69 = vld [vmem:[#allocation5 + $0x10] sm:$0xff]
    %v70 = vld [vmem:[#allocation5 + $0x18] sm:$0xff]
    %v71 = vld [vmem:[%s2] sm:$0x1]
    %v73 = vperm.slane %v71, 0
    %vm75 = vcmask 261120
    %v77 = vsel %vm75, %v66, 0
    %79 = vmatpush.msra.mxu0 0.0
    %80 = vmatpush.msra.mxu0 0.0
    %81 = vmatpush.msra.mxu0 0.0
    %82 = vmatpush.msra.mxu0 0.0
    %83 = vmatpush.msra.mxu0 0.0
    %84 = vmatpush.msra.mxu0 0.0
    %85 = vmatpush.msra.mxu0 0.0
    %86 = vmatpush.msra.mxu0 0.0
    %87 = vmatpush.msra.mxu0 0.0
    %88 = vmatpush.msra.mxu0 0.0
    %89 = vmatpush.msra.mxu0 0.0
    %90 = vmatpush.msra.mxu0 0.0
    %91 = vmatpush.msra.mxu0 %v70
    %92 = vmatpush.msra.mxu0 %v69
    %93 = vmatpush.msra.mxu0 %v68
    %94 = vmatpush.msra.mxu0 %v67
    %95 = vmatmul.f32.gmra.mxu0 %v77
    %v96 = vpop.f32.mrf.mxu0
    %v97 = vadd.f32 %v73, %v96
    %98 = vdwg.mxu0
    %v99 = vmax.f32 %v97, 0.0
    %v100 = vld [vmem:[#allocation7] sm:$0xff]
    %v101 = vld [vmem:[#allocation7 + $0x8] sm:$0xff]
    %v102 = vld [vmem:[#allocation7 + $0x10] sm:$0xff]
    %v103 = vld [vmem:[#allocation7 + $0x18] sm:$0xff]
    %v104 = vld [vmem:[%s4] sm:$0x1]
    %v106 = vperm.slane %v104, 0
    %v109 = vsel %vm75, %v99, 0
    %111 = vmatpush.msra.mxu0 0.0
    %112 = vmatpush.msra.mxu0 0.0
    %113 = vmatpush.msra.mxu0 0.0
    %114 = vmatpush.msra.mxu0 0.0
    %115 = vmatpush.msra.mxu0 0.0
    %116 = vmatpush.msra.mxu0 0.0
    %117 = vmatpush.msra.mxu0 0.0
    %118 = vmatpush.msra.mxu0 0.0
    %119 = vmatpush.msra.mxu0 0.0
    %120 = vmatpush.msra.mxu0 0.0
    %121 = vmatpush.msra.mxu0 0.0
    %122 = vmatpush.msra.mxu0 0.0
    %123 = vmatpush.msra.mxu0 %v103
    %124 = vmatpush.msra.mxu0 %v102
    %125 = vmatpush.msra.mxu0 %v101
    %126 = vmatpush.msra.mxu0 %v100
    %127 = vmatmul.f32.gmra.mxu0 %v109
    %v128 = vpop.f32.mrf.mxu0
    %v129 = vadd.f32 %v106, %v128
    %130 = vdwg.mxu0
    %v131 = vlaneseq
    %v132 = vand.u32 %v131, 127
    %v133 = vsub.f32 0.0, %v129
    %v134 = vmul.f32 %v133, 1.442695
    %v135 = vpow.pop %v134
    %v136 = vadd.f32 %v135, 1.0
    %v137 = vrcp.pop %v136
    %v138 = vmul.f32 %v136, %v137
    %v139 = vsub.f32 1.0, %v138
    %v140 = vmul.f32 %v137, %v139
    %v141 = vadd.f32 %v137, %v140
    %vm142 = vweird.f32 %v136
    %vm143 = vweird.f32 %v137
    %vm144 = vmor %vm142, %vm143
    %v145 = vsel %vm144, %v137, %v141
    %v146 = vand.u32 2147483647, %v136
    %vm147 = vcmp.eq.f32.partialorder %v146, 8.507059e+37
    %v148 = vand.u32 %v136, 2147483648
    %v149 = vor.u32 1.1754944e-38, %v148
    %v150 = vsel %vm147, %v149, %v145
    %vm151 = vcmp.eq.s32.totalorder %v132, 16
    %v152 = vsel %vm151, %v150, %v129
    %153 = vst.msk [vmem:[#allocation8] sm:$0xff] %vm75, %v152
    // Predicated region
    $region34: #{tpu_custom_call.1} parent=1 // pred_check
      _
    $region35: #{tpu_custom_call.1} parent=1 // pred_check_branch
      %155 = sbr.rel (0) target = $region37
    $region36: #{tpu_custom_call.1} parent=1 // pred_region
      %157 = vsyncadd [#allocation4], 0
      %s159 = sshll.u32 [#allocation8], 4
      %s160 = int_to_ptr.vmem [resolvable:$true] %s159
      %s161 = sshll.u32 %s5, 4
      %s162 = int_to_ptr.hbm [resolvable:$true] %s161
      %164 = dma.vmem_to_hbm [thread:$0]  %s160, 128, %s162, [#allocation4]
    $region37: #{tpu_custom_call.1} parent=1 // pred_fallthru
      _
    // Predicated region
    $region38: #{tpu_custom_call.1} parent=1 // pred_check
      _
    $region39: #{tpu_custom_call.1} parent=1 // pred_check_branch
      %166 = sbr.rel (0) target = $region41
    $region40: #{tpu_custom_call.1} parent=1 // pred_region
      %168 = dma.done [#allocation4], 128
    $region41: #{tpu_custom_call.1} parent=1 // pred_fallthru
      _
    %169 = vsyncpa [#allocation3], 1
    %170 = vsyncpa [#allocation6], 1
    %171 = vsyncpa [#allocation4], 1

</llo_original>
